<compile_context>
chip_gen: v7x
topology: tpu7x:2x2x1
jax: 0.10.0
libtpu: 0.0.40
codegen_flags: <defaults>
</compile_context>

<pallas_src>
import functools
import math

import jax
import jax.numpy as jnp
from jax.experimental import pallas as pl
from jax.experimental.pallas import tpu as pltpu

LANES = 128
MAX_BLOCK_ROWS = 2048      # (2048,128) f32 = 1 MiB per operand per block; sweep per generation

_SMOOTH = 1e-4
_LOG_SMOOTH = math.log(_SMOOTH)
_LOG_ONE_MINUS_SMOOTH = math.log(1.0 - _SMOOTH)


def _round_up(a, b):
    return -(-a // b) * b


def _cdiv(a, b):
    return -(-a // b)


def _num_tensorcores():
    """2 on chips whose single JAX device spans 2 TensorCores (v7x, megacore v4/v5p),
    1 on single-TC v5e/v6e.  Wrong-high only costs one fully-masked overhang step."""
    # TODO(synk): confirm with an xprof trace that the 'parallel' axis actually shards onto
    # both v7x TensorCores; if not, switch that axis to pltpu.CORE_PARALLEL or pl.core_map.
    try:
        kind = jax.devices()[0].device_kind.lower()
    except Exception:
        return 2
    single_tc = ("v5 lite", "v5e", "v5litepod", "v6 lite", "v6e", "v4 lite", "v4i")
    if any(s in kind for s in single_tc):
        return 1
    return 2


def _pow(x, gamma):
    """x**gamma with plain multiplies for small integer gamma (pow = exp+log on the one EUP slot)."""
    g = float(gamma)
    if g == 0.0:
        return jnp.ones_like(x)
    if g.is_integer() and 1.0 <= g <= 8.0:
        r = x
        for _ in range(int(g) - 1):
            r = r * x
        return r
    return jnp.power(x, g)


def _focal_sums_kernel(x_ref, t_ref, out_ref, acc_ref, *, gamma, ignore_index, rows):
    """Accumulates (4, 8, 128) partials of [pos_num, pos_den, neg_num, neg_den]."""
    c = pl.program_id(0)          # core-split axis ('parallel')
    i = pl.program_id(1)          # row-block sweep ('arbitrary')
    inner = pl.num_programs(1)
    br = x_ref.shape[0]

    @pl.when(i == 0)
    def _init():
        acc_ref[...] = jnp.zeros_like(acc_ref)

    row0 = (c * inner + i) * br   # logical (unclamped) first row of this block

    def masks(t):
        pos = t == 1
        neg = t == 0
        if ignore_index is not None:
            keep = t != ignore_index
            pos = jnp.logical_and(pos, keep)
            neg = jnp.logical_and(neg, keep)
        return pos, neg

    def accumulate(x, pos, neg):
        # Fused logistic math: one exp, one log1p, one divide per element; relu reused.
        r = jnp.maximum(x, 0.0)
        e = jnp.exp(x - (r + r))                      # exp(-|x|)
        l1p = jnp.log1p(e)
        # TODO(synk): pl.reciprocal(1.0 + e, approx=True) would push this divide fully onto the
        # EUP slot; needs a tolerance re-check before landing, so keep the exact divide.
        inv = 1.0 / (1.0 + e)
        prob = jnp.where(x >= 0.0, inv, e * inv)      # sigmoid(x), exact
        prob = jnp.clip(prob, _SMOOTH, 1.0 - _SMOOTH)
        # log(clip(sigmoid(x), s, 1-s)) == clip(logsigmoid(x), log s, log(1-s)) by monotonicity:
        log_prob = jnp.clip((x - r) - l1p, _LOG_SMOOTH, _LOG_ONE_MINUS_SMOOTH)
        log_sig_neg = -(r + l1p)                      # logsigmoid(-x), unclipped

        pos_w = jnp.where(pos, _pow(1.0 - prob, gamma), 0.0)
        neg_w = jnp.where(neg, _pow(prob, gamma), 0.0)

        def psum(v):                                   # (br,128) -> (8,128): vreg adds only
            return jnp.sum(v.reshape(br // 8, 8, LANES), axis=0)

        acc_ref[0] += psum(pos_w * log_prob)
        acc_ref[1] += psum(pos_w)
        acc_ref[2] += psum(neg_w * log_sig_neg)
        acc_ref[3] += psum(neg_w)

    is_full = row0 + br <= rows

    @pl.when(is_full)
    def _full_block():
        # Fast path for full blocks: no iota, no validity compares, no selects on x.
        pos, neg = masks(t_ref[...])
        accumulate(x_ref[...].astype(jnp.float32), pos, neg)

    @pl.when(jnp.logical_not(is_full))
    def _partial_block():
        # Ragged last block and the clamped core-split overhang block.  The mask is built from
        # the UNCLAMPED logical block index so stale/duplicate VMEM rows contribute nothing,
        # and x is zeroed on invalid rows so no inf/NaN can reach the 0-weighted log terms.
        rvalid = (row0 + jax.lax.broadcasted_iota(jnp.int32, (br, LANES), 0)) < rows
        pos, neg = masks(t_ref[...])
        pos = jnp.logical_and(pos, rvalid)
        neg = jnp.logical_and(neg, rvalid)
        x = jnp.where(rvalid, x_ref[...].astype(jnp.float32), 0.0)
        accumulate(x, pos, neg)

    @pl.when(i == inner - 1)
    def _finalize():
        out_ref[...] = acc_ref[...]


def _partial_sums_jax(x, t, gamma, ignore_index):
    """Plain-JAX [pos_num, pos_den, neg_num, neg_den] for the <=127-element ragged tail."""
    x = x.astype(jnp.float32)
    prob = jnp.clip(jax.nn.sigmoid(x), _SMOOTH, 1.0 - _SMOOTH)
    pos = t == 1
    neg = t == 0
    if ignore_index is not None:
        keep = t != ignore_index
        pos = jnp.logical_and(pos, keep)
        neg = jnp.logical_and(neg, keep)
    pos_w = jnp.where(pos, jnp.power(1.0 - prob, gamma), 0.0)
    neg_w = jnp.where(neg, jnp.power(prob, gamma), 0.0)
    log_sig_neg = -jnp.maximum(x, 0.0) - jnp.log1p(jnp.exp(-jnp.abs(x)))
    return jnp.stack([jnp.sum(pos_w * jnp.log(prob)), jnp.sum(pos_w),
                      jnp.sum(neg_w * log_sig_neg), jnp.sum(neg_w)])


def binary_focal_loss(output, target, *, alpha=3.0, gamma=2.0,
                      ignore_index=None, reduction="mean"):
    """Matches BinaryFocalLoss.forward (scalar loss; `reduction` is only validated, exactly
    like the PyTorch reference which never applies it)."""
    assert reduction in ("none", "mean", "sum")

    x = output.reshape(-1)
    t = target.reshape(-1)
    n = int(x.shape[0])
    rows = n // LANES
    rem = n - rows * LANES

    sums = jnp.zeros((4,), jnp.float32)

    if rows > 0:
        m = rows * LANES
        if rem:
            # TODO(synk): XLA may still materialize this aligned-prefix slice as one copy per
            # operand for ragged n; a fully copy-free ragged path needs 1-D blocks or manual
            # DMA from a pl.ANY ref.
            x2 = x[:m].reshape(rows, LANES)
            t2 = t[:m].reshape(rows, LANES)
        else:
            x2 = x.reshape(rows, LANES)      # free view: n is already lane-aligned
            t2 = t.reshape(rows, LANES)

        block_rows = min(MAX_BLOCK_ROWS, _round_up(rows, 8))
        n_blocks = _cdiv(rows, block_rows)
        n_cores = _num_tensorcores()
        inner = _cdiv(n_blocks, n_cores)

        if n_cores == 1:
            def in_index_map(c, i):
                return (i, 0)
        else:
            def in_index_map(c, i):
                # Clamp so the DMA never starts past the array; the overhang block is fully
                # masked in-kernel (its logical row0 >= rows).
                return (jnp.minimum(c * inner + i, n_blocks - 1), 0)

        kernel = functools.partial(_focal_sums_kernel, gamma=float(gamma),
                                   ignore_index=ignore_index, rows=rows)

        partial_sums = pl.pallas_call(
            kernel,
            out_shape=jax.ShapeDtypeStruct((n_cores, 4, 8, LANES), jnp.float32),
            grid_spec=pltpu.PrefetchScalarGridSpec(
                num_scalar_prefetch=0,
                grid=(n_cores, inner),
                in_specs=[
                    pl.BlockSpec((block_rows, LANES), in_index_map),
                    pl.BlockSpec((block_rows, LANES), in_index_map),
                ],
                out_specs=pl.BlockSpec((None, 4, 8, LANES), lambda c, i: (c, 0, 0, 0)),
                scratch_shapes=[pltpu.VMEM((4, 8, LANES), jnp.float32)],
            ),
            compiler_params=pltpu.CompilerParams(
                dimension_semantics=("parallel", "arbitrary"),
                vmem_limit_bytes=32 * 1024 * 1024,
            ),
        )(x2, t2)

        sums = sums + jnp.sum(partial_sums, axis=(0, 2, 3))

    if rem:
        sums = sums + _partial_sums_jax(x[rows * LANES:], t[rows * LANES:],
                                        float(gamma), ignore_index)

    pos_loss = -sums[0] / (sums[1] + 1e-4)
    neg_loss = -float(alpha) * sums[2] / (sums[3] + 1e-4)
    return pos_loss + neg_loss


def _reference_binary_focal_loss(output, target, *, alpha=3.0, gamma=2.0, ignore_index=None):
    """Pure-JAX transcription of the PyTorch forward, for verification."""
    smooth = 1e-4
    prob = jnp.clip(jax.nn.sigmoid(output), smooth, 1.0 - smooth)
    pos_mask = (target == 1).astype(jnp.float32)
    neg_mask = (target == 0).astype(jnp.float32)
    if ignore_index is not None:
        valid = (target != ignore_index).astype(jnp.float32)
        pos_mask = pos_mask * valid
        neg_mask = neg_mask * valid
    pos_w = pos_mask * jnp.power(1.0 - prob, gamma)
    pos_loss = -jnp.sum(pos_w * jnp.log(prob)) / (jnp.sum(pos_w) + 1e-4)
    neg_w = neg_mask * jnp.power(prob, gamma)
    log_sig_neg = -jnp.maximum(output, 0.0) - jnp.log1p(jnp.exp(-jnp.abs(output)))
    neg_loss = -alpha * jnp.sum(neg_w * log_sig_neg) / (jnp.sum(neg_w) + 1e-4)
    return pos_loss + neg_loss


if __name__ == "__main__":
    key = jax.random.PRNGKey(0)
    k1, k2, k3, k4, k5, k6 = jax.random.split(key, 6)

    # 1) Small NCHW logits with {0,1} targets (binary segmentation style); n % 128 == 0, so the
    #    whole stream is kernel-side with zero host-side copies.
    logits = jax.random.normal(k1, (2, 4, 16, 16), dtype=jnp.float32)
    targets = jax.random.bernoulli(k2, p=0.3, shape=(2, 4, 16, 16)).astype(jnp.float32)
    loss = jax.block_until_ready(
        binary_focal_loss(logits, targets, alpha=3.0, gamma=2.0, reduction="mean"))
    ref = _reference_binary_focal_loss(logits, targets, alpha=3.0, gamma=2.0)
    assert jnp.allclose(loss, ref, rtol=1e-4, atol=1e-4), (loss, ref)

    # 2) Ragged element count (1155 = 9*128 + 3): kernel handles the aligned prefix (partial
    #    last block via the masked branch), the 3-element tail is folded in by the JAX glue.
    logits2 = 3.0 * jax.random.normal(k3, (3, 5, 7, 11), dtype=jnp.float32)
    targets2 = jax.random.bernoulli(k4, p=0.5, shape=(3, 5, 7, 11)).astype(jnp.float32)
    loss2 = jax.block_until_ready(binary_focal_loss(logits2, targets2))
    ref2 = _reference_binary_focal_loss(logits2, targets2)
    assert jnp.allclose(loss2, ref2, rtol=1e-4, atol=1e-4), (loss2, ref2)

    # 3) ignore_index path: a third class label (2) is excluded from both sums.
    logits3 = jax.random.normal(k5, (2, 3, 16, 16), dtype=jnp.float32)
    targets3 = jnp.floor(jax.random.uniform(k6, (2, 3, 16, 16)) * 3.0).astype(jnp.float32)
    loss3 = jax.block_until_ready(binary_focal_loss(logits3, targets3, ignore_index=2))
    ref3 = _reference_binary_focal_loss(logits3, targets3, ignore_index=2)
    assert jnp.allclose(loss3, ref3, rtol=1e-4, atol=1e-4), (loss3, ref3)

    print("KERNEL_OK")
</pallas_src>

<mosaic_0001>
module attributes {stable_mosaic.version = 11 : i64} {
  func.func @_focal_sums_kernel(%arg0: i32, %arg1: i32, %arg2: memref<16x128xf32, #tpu.memory_space<vmem>>, %arg3: memref<16x128xf32, #tpu.memory_space<vmem>>, %arg4: memref<1x4x8x128xf32, #tpu.memory_space<vmem>>, %arg5: memref<4x8x128xf32, #tpu.memory_space<vmem>>) attributes {dimension_semantics = [#tpu.dimension_semantics<parallel>, #tpu.dimension_semantics<arbitrary>], iteration_bounds = array<i64: 2, 1>, scalar_prefetch = 0 : i64, scratch_operands = 1 : i64, tpu.core_type = #tpu.core_type<tc>, window_params = [{transform_indices = @transform_0, window_bounds = array<i64: 16, 128>}, {transform_indices = @transform_1, window_bounds = array<i64: 16, 128>}, {transform_indices = @transform_2, window_bounds = array<i64: 1, 4, 8, 128>}]} {
    %c0_i32 = arith.constant 0 : i32
    %0 = arith.cmpi eq, %arg1, %c0_i32 : i32
    %1 = arith.extui %0 : i1 to i32
    %c0_i32_0 = arith.constant 0 : i32
    %2 = arith.cmpi ne, %1, %c0_i32_0 : i32
    scf.if %2 {
      %cst = arith.constant 0.000000e+00 : f32
      %16 = vector.broadcast %cst : f32 to vector<4x8x128xf32>
      %c0 = arith.constant 0 : index
      %c0_7 = arith.constant 0 : index
      %c0_8 = arith.constant 0 : index
      %17 = vector.load %arg5[%c0, %c0_7, %c0_8] : memref<4x8x128xf32, #tpu.memory_space<vmem>>, vector<4x8x128xf32>
      tpu.vector_store %arg5[%c0, %c0_7, %c0_8], %16 {strides = array<i32>} : memref<4x8x128xf32, #tpu.memory_space<vmem>>, vector<4x8x128xf32>,
    } else {
    }
    %c1_i32 = arith.constant 1 : i32
    %3 = arith.muli %arg0, %c1_i32 : i32
    %4 = arith.addi %3, %arg1 : i32
    %c16_i32 = arith.constant 16 : i32
    %5 = arith.muli %4, %c16_i32 : i32
    %c16_i32_1 = arith.constant 16 : i32
    %6 = arith.addi %5, %c16_i32_1 : i32
    %c16_i32_2 = arith.constant 16 : i32
    %7 = arith.cmpi sle, %6, %c16_i32_2 : i32
    %8 = arith.extui %7 : i1 to i32
    %c0_i32_3 = arith.constant 0 : i32
    %9 = arith.cmpi ne, %8, %c0_i32_3 : i32
    scf.if %9 {
      %c0 = arith.constant 0 : index
      %c0_7 = arith.constant 0 : index
      %16 = vector.load %arg3[%c0, %c0_7] : memref<16x128xf32, #tpu.memory_space<vmem>>, vector<16x128xf32>
      %cst = arith.constant 1.000000e+00 : f32
      %17 = vector.broadcast %cst : f32 to vector<16x128xf32>
      %18 = arith.cmpf oeq, %16, %17 : vector<16x128xf32>
      %cst_8 = arith.constant 0.000000e+00 : f32
      %19 = vector.broadcast %cst_8 : f32 to vector<16x128xf32>
      %20 = arith.cmpf oeq, %16, %19 : vector<16x128xf32>
      %c0_9 = arith.constant 0 : index
      %c0_10 = arith.constant 0 : index
      %21 = vector.load %arg2[%c0_9, %c0_10] : memref<16x128xf32, #tpu.memory_space<vmem>>, vector<16x128xf32>
      %cst_11 = arith.constant 0.000000e+00 : f32
      %22 = vector.broadcast %cst_11 : f32 to vector<16x128xf32>
      %23 = arith.maximumf %21, %22 : vector<16x128xf32>
      %24 = arith.addf %23, %23 : vector<16x128xf32>
      %25 = arith.subf %21, %24 : vector<16x128xf32>
      %26 = math.exp %25 : vector<16x128xf32>
      %27 = math.log1p %26 : vector<16x128xf32>
      %cst_12 = arith.constant 1.000000e+00 : f32
      %28 = vector.broadcast %cst_12 : f32 to vector<16x128xf32>
      %29 = arith.addf %28, %26 : vector<16x128xf32>
      %cst_13 = arith.constant 1.000000e+00 : f32
      %30 = vector.broadcast %cst_13 : f32 to vector<16x128xf32>
      %31 = arith.divf %30, %29 : vector<16x128xf32>
      %cst_14 = arith.constant 0.000000e+00 : f32
      %32 = vector.broadcast %cst_14 : f32 to vector<16x128xf32>
      %33 = arith.cmpf oge, %21, %32 : vector<16x128xf32>
      %34 = arith.mulf %26, %31 : vector<16x128xf32>
      %35 = arith.select %33, %31, %34 : vector<16x128xi1>, vector<16x128xf32>
      %cst_15 = arith.constant 9.99999974E-5 : f32
      %cst_16 = arith.constant 0.999899983 : f32
      %36 = vector.broadcast %cst_15 : f32 to vector<16x128xf32>
      %37 = arith.maximumf %36, %35 : vector<16x128xf32>
      %38 = vector.broadcast %cst_16 : f32 to vector<16x128xf32>
      %39 = arith.minimumf %38, %37 : vector<16x128xf32>
      %40 = arith.subf %21, %23 : vector<16x128xf32>
      %41 = arith.subf %40, %27 : vector<16x128xf32>
      %cst_17 = arith.constant -9.21034049 : f32
      %cst_18 = arith.constant -1.000050e-04 : f32
      %42 = vector.broadcast %cst_17 : f32 to vector<16x128xf32>
      %43 = arith.maximumf %42, %41 : vector<16x128xf32>
      %44 = vector.broadcast %cst_18 : f32 to vector<16x128xf32>
      %45 = arith.minimumf %44, %43 : vector<16x128xf32>
      %46 = arith.addf %23, %27 : vector<16x128xf32>
      %cst_19 = arith.constant 0.000000e+00 : f32
      %47 = vector.broadcast %cst_19 : f32 to vector<16x128xf32>
      %48 = arith.subf %47, %46 : vector<16x128xf32>
      %cst_20 = arith.constant 1.000000e+00 : f32
      %49 = vector.broadcast %cst_20 : f32 to vector<16x128xf32>
      %50 = arith.subf %49, %39 : vector<16x128xf32>
      %51 = arith.mulf %50, %50 : vector<16x128xf32>
      %cst_21 = arith.constant 0.000000e+00 : f32
      %52 = vector.broadcast %cst_21 : f32 to vector<16x128xf32>
      %53 = arith.select %18, %51, %52 : vector<16x128xi1>, vector<16x128xf32>
      %54 = arith.mulf %39, %39 : vector<16x128xf32>
      %cst_22 = arith.constant 0.000000e+00 : f32
      %55 = vector.broadcast %cst_22 : f32 to vector<16x128xf32>
      %56 = arith.select %20, %54, %55 : vector<16x128xi1>, vector<16x128xf32>
      %c0_23 = arith.constant 0 : index
      %c0_24 = arith.constant 0 : index
      %c0_25 = arith.constant 0 : index
      %57 = vector.load %arg5[%c0_23, %c0_24, %c0_25] : memref<4x8x128xf32, #tpu.memory_space<vmem>>, vector<1x8x128xf32>
      %58 = vector.shape_cast %57 : vector<1x8x128xf32> to vector<8x128xf32>
      %59 = arith.mulf %53, %45 : vector<16x128xf32>
      %60 = vector.shape_cast %59 : vector<16x128xf32> to vector<2x8x128xf32>
      %cst_26 = arith.constant dense<0.000000e+00> : vector<8x128xf32>
      %61 = vector.multi_reduction <add>, %60, %cst_26 [0] : vector<2x8x128xf32> to vector<8x128xf32>
      %62 = arith.addf %58, %61 : vector<8x128xf32>
      %c0_27 = arith.constant 0 : index
      %c0_28 = arith.constant 0 : index
      %c0_29 = arith.constant 0 : index
      %63 = vector.load %arg5[%c0_27, %c0_28, %c0_29] : memref<4x8x128xf32, #tpu.memory_space<vmem>>, vector<1x8x128xf32>
      %64 = vector.shape_cast %63 : vector<1x8x128xf32> to vector<8x128xf32>
      %65 = vector.shape_cast %62 : vector<8x128xf32> to vector<1x8x128xf32>
      tpu.vector_store %arg5[%c0_27, %c0_28, %c0_29], %65 {strides = array<i32>} : memref<4x8x128xf32, #tpu.memory_space<vmem>>, vector<1x8x128xf32>,
      %c1 = arith.constant 1 : index
      %c0_30 = arith.constant 0 : index
      %c0_31 = arith.constant 0 : index
      %66 = vector.load %arg5[%c1, %c0_30, %c0_31] : memref<4x8x128xf32, #tpu.memory_space<vmem>>, vector<1x8x128xf32>
      %67 = vector.shape_cast %66 : vector<1x8x128xf32> to vector<8x128xf32>
      %68 = vector.shape_cast %53 : vector<16x128xf32> to vector<2x8x128xf32>
      %cst_32 = arith.constant dense<0.000000e+00> : vector<8x128xf32>
      %69 = vector.multi_reduction <add>, %68, %cst_32 [0] : vector<2x8x128xf32> to vector<8x128xf32>
      %70 = arith.addf %67, %69 : vector<8x128xf32>
      %c1_33 = arith.constant 1 : index
      %c0_34 = arith.constant 0 : index
      %c0_35 = arith.constant 0 : index
      %71 = vector.load %arg5[%c1_33, %c0_34, %c0_35] : memref<4x8x128xf32, #tpu.memory_space<vmem>>, vector<1x8x128xf32>
      %72 = vector.shape_cast %71 : vector<1x8x128xf32> to vector<8x128xf32>
      %73 = vector.shape_cast %70 : vector<8x128xf32> to vector<1x8x128xf32>
      tpu.vector_store %arg5[%c1_33, %c0_34, %c0_35], %73 {strides = array<i32>} : memref<4x8x128xf32, #tpu.memory_space<vmem>>, vector<1x8x128xf32>,
      %c2 = arith.constant 2 : index
      %c0_36 = arith.constant 0 : index
      %c0_37 = arith.constant 0 : index
      %74 = vector.load %arg5[%c2, %c0_36, %c0_37] : memref<4x8x128xf32, #tpu.memory_space<vmem>>, vector<1x8x128xf32>
      %75 = vector.shape_cast %74 : vector<1x8x128xf32> to vector<8x128xf32>
      %76 = arith.mulf %56, %48 : vector<16x128xf32>
      %77 = vector.shape_cast %76 : vector<16x128xf32> to vector<2x8x128xf32>
      %cst_38 = arith.constant dense<0.000000e+00> : vector<8x128xf32>
      %78 = vector.multi_reduction <add>, %77, %cst_38 [0] : vector<2x8x128xf32> to vector<8x128xf32>
      %79 = arith.addf %75, %78 : vector<8x128xf32>
      %c2_39 = arith.constant 2 : index
      %c0_40 = arith.constant 0 : index
      %c0_41 = arith.constant 0 : index
      %80 = vector.load %arg5[%c2_39, %c0_40, %c0_41] : memref<4x8x128xf32, #tpu.memory_space<vmem>>, vector<1x8x128xf32>
      %81 = vector.shape_cast %80 : vector<1x8x128xf32> to vector<8x128xf32>
      %82 = vector.shape_cast %79 : vector<8x128xf32> to vector<1x8x128xf32>
      tpu.vector_store %arg5[%c2_39, %c0_40, %c0_41], %82 {strides = array<i32>} : memref<4x8x128xf32, #tpu.memory_space<vmem>>, vector<1x8x128xf32>,
      %c3 = arith.constant 3 : index
      %c0_42 = arith.constant 0 : index
      %c0_43 = arith.constant 0 : index
      %83 = vector.load %arg5[%c3, %c0_42, %c0_43] : memref<4x8x128xf32, #tpu.memory_space<vmem>>, vector<1x8x128xf32>
      %84 = vector.shape_cast %83 : vector<1x8x128xf32> to vector<8x128xf32>
      %85 = vector.shape_cast %56 : vector<16x128xf32> to vector<2x8x128xf32>
      %cst_44 = arith.constant dense<0.000000e+00> : vector<8x128xf32>
      %86 = vector.multi_reduction <add>, %85, %cst_44 [0] : vector<2x8x128xf32> to vector<8x128xf32>
      %87 = arith.addf %84, %86 : vector<8x128xf32>
      %c3_45 = arith.constant 3 : index
      %c0_46 = arith.constant 0 : index
      %c0_47 = arith.constant 0 : index
      %88 = vector.load %arg5[%c3_45, %c0_46, %c0_47] : memref<4x8x128xf32, #tpu.memory_space<vmem>>, vector<1x8x128xf32>
      %89 = vector.shape_cast %88 : vector<1x8x128xf32> to vector<8x128xf32>
      %90 = vector.shape_cast %87 : vector<8x128xf32> to vector<1x8x128xf32>
      tpu.vector_store %arg5[%c3_45, %c0_46, %c0_47], %90 {strides = array<i32>} : memref<4x8x128xf32, #tpu.memory_space<vmem>>, vector<1x8x128xf32>,
    } else {
    }
    %true = arith.constant true
    %10 = arith.xori %7, %true : i1
    %11 = arith.extui %10 : i1 to i32
    %c0_i32_4 = arith.constant 0 : i32
    %12 = arith.cmpi ne, %11, %c0_i32_4 : i32
    scf.if %12 {
      %16 = tpu.iota {dimensions = array<i32: 0>} : vector<16x128xi32>
      %17 = vector.broadcast %5 : i32 to vector<16x128xi32>
      %18 = arith.addi %17, %16 : vector<16x128xi32>
      %c16_i32_7 = arith.constant 16 : i32
      %19 = vector.broadcast %c16_i32_7 : i32 to vector<16x128xi32>
      %20 = arith.cmpi slt, %18, %19 : vector<16x128xi32>
      %c0 = arith.constant 0 : index
      %c0_8 = arith.constant 0 : index
      %21 = vector.load %arg3[%c0, %c0_8] : memref<16x128xf32, #tpu.memory_space<vmem>>, vector<16x128xf32>
      %cst = arith.constant 1.000000e+00 : f32
      %22 = vector.broadcast %cst : f32 to vector<16x128xf32>
      %23 = arith.cmpf oeq, %21, %22 : vector<16x128xf32>
      %cst_9 = arith.constant 0.000000e+00 : f32
      %24 = vector.broadcast %cst_9 : f32 to vector<16x128xf32>
      %25 = arith.cmpf oeq, %21, %24 : vector<16x128xf32>
      %26 = arith.andi %23, %20 : vector<16x128xi1>
      %27 = arith.andi %25, %20 : vector<16x128xi1>
      %c0_10 = arith.constant 0 : index
      %c0_11 = arith.constant 0 : index
      %28 = vector.load %arg2[%c0_10, %c0_11] : memref<16x128xf32, #tpu.memory_space<vmem>>, vector<16x128xf32>
      %cst_12 = arith.constant 0.000000e+00 : f32
      %29 = vector.broadcast %cst_12 : f32 to vector<16x128xf32>
      %30 = arith.select %20, %28, %29 : vector<16x128xi1>, vector<16x128xf32>
      %cst_13 = arith.constant 0.000000e+00 : f32
      %31 = vector.broadcast %cst_13 : f32 to vector<16x128xf32>
      %32 = arith.maximumf %30, %31 : vector<16x128xf32>
      %33 = arith.addf %32, %32 : vector<16x128xf32>
      %34 = arith.subf %30, %33 : vector<16x128xf32>
      %35 = math.exp %34 : vector<16x128xf32>
      %36 = math.log1p %35 : vector<16x128xf32>
      %cst_14 = arith.constant 1.000000e+00 : f32
      %37 = vector.broadcast %cst_14 : f32 to vector<16x128xf32>
      %38 = arith.addf %37, %35 : vector<16x128xf32>
      %cst_15 = arith.constant 1.000000e+00 : f32
      %39 = vector.broadcast %cst_15 : f32 to vector<16x128xf32>
      %40 = arith.divf %39, %38 : vector<16x128xf32>
      %cst_16 = arith.constant 0.000000e+00 : f32
      %41 = vector.broadcast %cst_16 : f32 to vector<16x128xf32>
      %42 = arith.cmpf oge, %30, %41 : vector<16x128xf32>
      %43 = arith.mulf %35, %40 : vector<16x128xf32>
      %44 = arith.select %42, %40, %43 : vector<16x128xi1>, vector<16x128xf32>
      %cst_17 = arith.constant 9.99999974E-5 : f32
      %cst_18 = arith.constant 0.999899983 : f32
      %45 = vector.broadcast %cst_17 : f32 to vector<16x128xf32>
      %46 = arith.maximumf %45, %44 : vector<16x128xf32>
      %47 = vector.broadcast %cst_18 : f32 to vector<16x128xf32>
      %48 = arith.minimumf %47, %46 : vector<16x128xf32>
      %49 = arith.subf %30, %32 : vector<16x128xf32>
      %50 = arith.subf %49, %36 : vector<16x128xf32>
      %cst_19 = arith.constant -9.21034049 : f32
      %cst_20 = arith.constant -1.000050e-04 : f32
      %51 = vector.broadcast %cst_19 : f32 to vector<16x128xf32>
      %52 = arith.maximumf %51, %50 : vector<16x128xf32>
      %53 = vector.broadcast %cst_20 : f32 to vector<16x128xf32>
      %54 = arith.minimumf %53, %52 : vector<16x128xf32>
      %55 = arith.addf %32, %36 : vector<16x128xf32>
      %cst_21 = arith.constant 0.000000e+00 : f32
      %56 = vector.broadcast %cst_21 : f32 to vector<16x128xf32>
      %57 = arith.subf %56, %55 : vector<16x128xf32>
      %cst_22 = arith.constant 1.000000e+00 : f32
      %58 = vector.broadcast %cst_22 : f32 to vector<16x128xf32>
      %59 = arith.subf %58, %48 : vector<16x128xf32>
      %60 = arith.mulf %59, %59 : vector<16x128xf32>
      %cst_23 = arith.constant 0.000000e+00 : f32
      %61 = vector.broadcast %cst_23 : f32 to vector<16x128xf32>
      %62 = arith.select %26, %60, %61 : vector<16x128xi1>, vector<16x128xf32>
      %63 = arith.mulf %48, %48 : vector<16x128xf32>
      %cst_24 = arith.constant 0.000000e+00 : f32
      %64 = vector.broadcast %cst_24 : f32 to vector<16x128xf32>
      %65 = arith.select %27, %63, %64 : vector<16x128xi1>, vector<16x128xf32>
      %c0_25 = arith.constant 0 : index
      %c0_26 = arith.constant 0 : index
      %c0_27 = arith.constant 0 : index
      %66 = vector.load %arg5[%c0_25, %c0_26, %c0_27] : memref<4x8x128xf32, #tpu.memory_space<vmem>>, vector<1x8x128xf32>
      %67 = vector.shape_cast %66 : vector<1x8x128xf32> to vector<8x128xf32>
      %68 = arith.mulf %62, %54 : vector<16x128xf32>
      %69 = vector.shape_cast %68 : vector<16x128xf32> to vector<2x8x128xf32>
      %cst_28 = arith.constant dense<0.000000e+00> : vector<8x128xf32>
      %70 = vector.multi_reduction <add>, %69, %cst_28 [0] : vector<2x8x128xf32> to vector<8x128xf32>
      %71 = arith.addf %67, %70 : vector<8x128xf32>
      %c0_29 = arith.constant 0 : index
      %c0_30 = arith.constant 0 : index
      %c0_31 = arith.constant 0 : index
      %72 = vector.load %arg5[%c0_29, %c0_30, %c0_31] : memref<4x8x128xf32, #tpu.memory_space<vmem>>, vector<1x8x128xf32>
      %73 = vector.shape_cast %72 : vector<1x8x128xf32> to vector<8x128xf32>
      %74 = vector.shape_cast %71 : vector<8x128xf32> to vector<1x8x128xf32>
      tpu.vector_store %arg5[%c0_29, %c0_30, %c0_31], %74 {strides = array<i32>} : memref<4x8x128xf32, #tpu.memory_space<vmem>>, vector<1x8x128xf32>,
      %c1 = arith.constant 1 : index
      %c0_32 = arith.constant 0 : index
      %c0_33 = arith.constant 0 : index
      %75 = vector.load %arg5[%c1, %c0_32, %c0_33] : memref<4x8x128xf32, #tpu.memory_space<vmem>>, vector<1x8x128xf32>
      %76 = vector.shape_cast %75 : vector<1x8x128xf32> to vector<8x128xf32>
      %77 = vector.shape_cast %62 : vector<16x128xf32> to vector<2x8x128xf32>
      %cst_34 = arith.constant dense<0.000000e+00> : vector<8x128xf32>
      %78 = vector.multi_reduction <add>, %77, %cst_34 [0] : vector<2x8x128xf32> to vector<8x128xf32>
      %79 = arith.addf %76, %78 : vector<8x128xf32>
      %c1_35 = arith.constant 1 : index
      %c0_36 = arith.constant 0 : index
      %c0_37 = arith.constant 0 : index
      %80 = vector.load %arg5[%c1_35, %c0_36, %c0_37] : memref<4x8x128xf32, #tpu.memory_space<vmem>>, vector<1x8x128xf32>
      %81 = vector.shape_cast %80 : vector<1x8x128xf32> to vector<8x128xf32>
      %82 = vector.shape_cast %79 : vector<8x128xf32> to vector<1x8x128xf32>
      tpu.vector_store %arg5[%c1_35, %c0_36, %c0_37], %82 {strides = array<i32>} : memref<4x8x128xf32, #tpu.memory_space<vmem>>, vector<1x8x128xf32>,
      %c2 = arith.constant 2 : index
      %c0_38 = arith.constant 0 : index
      %c0_39 = arith.constant 0 : index
      %83 = vector.load %arg5[%c2, %c0_38, %c0_39] : memref<4x8x128xf32, #tpu.memory_space<vmem>>, vector<1x8x128xf32>
      %84 = vector.shape_cast %83 : vector<1x8x128xf32> to vector<8x128xf32>
      %85 = arith.mulf %65, %57 : vector<16x128xf32>
      %86 = vector.shape_cast %85 : vector<16x128xf32> to vector<2x8x128xf32>
      %cst_40 = arith.constant dense<0.000000e+00> : vector<8x128xf32>
      %87 = vector.multi_reduction <add>, %86, %cst_40 [0] : vector<2x8x128xf32> to vector<8x128xf32>
      %88 = arith.addf %84, %87 : vector<8x128xf32>
      %c2_41 = arith.constant 2 : index
      %c0_42 = arith.constant 0 : index
      %c0_43 = arith.constant 0 : index
      %89 = vector.load %arg5[%c2_41, %c0_42, %c0_43] : memref<4x8x128xf32, #tpu.memory_space<vmem>>, vector<1x8x128xf32>
      %90 = vector.shape_cast %89 : vector<1x8x128xf32> to vector<8x128xf32>
      %91 = vector.shape_cast %88 : vector<8x128xf32> to vector<1x8x128xf32>
      tpu.vector_store %arg5[%c2_41, %c0_42, %c0_43], %91 {strides = array<i32>} : memref<4x8x128xf32, #tpu.memory_space<vmem>>, vector<1x8x128xf32>,
      %c3 = arith.constant 3 : index
      %c0_44 = arith.constant 0 : index
      %c0_45 = arith.constant 0 : index
      %92 = vector.load %arg5[%c3, %c0_44, %c0_45] : memref<4x8x128xf32, #tpu.memory_space<vmem>>, vector<1x8x128xf32>
      %93 = vector.shape_cast %92 : vector<1x8x128xf32> to vector<8x128xf32>
      %94 = vector.shape_cast %65 : vector<16x128xf32> to vector<2x8x128xf32>
      %cst_46 = arith.constant dense<0.000000e+00> : vector<8x128xf32>
      %95 = vector.multi_reduction <add>, %94, %cst_46 [0] : vector<2x8x128xf32> to vector<8x128xf32>
      %96 = arith.addf %93, %95 : vector<8x128xf32>
      %c3_47 = arith.constant 3 : index
      %c0_48 = arith.constant 0 : index
      %c0_49 = arith.constant 0 : index
      %97 = vector.load %arg5[%c3_47, %c0_48, %c0_49] : memref<4x8x128xf32, #tpu.memory_space<vmem>>, vector<1x8x128xf32>
      %98 = vector.shape_cast %97 : vector<1x8x128xf32> to vector<8x128xf32>
      %99 = vector.shape_cast %96 : vector<8x128xf32> to vector<1x8x128xf32>
      tpu.vector_store %arg5[%c3_47, %c0_48, %c0_49], %99 {strides = array<i32>} : memref<4x8x128xf32, #tpu.memory_space<vmem>>, vector<1x8x128xf32>,
    } else {
    }
    %c0_i32_5 = arith.constant 0 : i32
    %13 = arith.cmpi eq, %arg1, %c0_i32_5 : i32
    %14 = arith.extui %13 : i1 to i32
    %c0_i32_6 = arith.constant 0 : i32
    %15 = arith.cmpi ne, %14, %c0_i32_6 : i32
    scf.if %15 {
      %c0 = arith.constant 0 : index
      %c0_7 = arith.constant 0 : index
      %c0_8 = arith.constant 0 : index
      %16 = vector.load %arg5[%c0, %c0_7, %c0_8] : memref<4x8x128xf32, #tpu.memory_space<vmem>>, vector<4x8x128xf32>
      %c0_9 = arith.constant 0 : index
      %c0_10 = arith.constant 0 : index
      %c0_11 = arith.constant 0 : index
      %c0_12 = arith.constant 0 : index
      %17 = vector.load %arg4[%c0_9, %c0_10, %c0_11, %c0_12] : memref<1x4x8x128xf32, #tpu.memory_space<vmem>>, vector<1x4x8x128xf32>
      %18 = vector.shape_cast %17 : vector<1x4x8x128xf32> to vector<4x8x128xf32>
      %19 = vector.shape_cast %16 : vector<4x8x128xf32> to vector<1x4x8x128xf32>
      tpu.vector_store %arg4[%c0_9, %c0_10, %c0_11, %c0_12], %19 {strides = array<i32>} : memref<1x4x8x128xf32, #tpu.memory_space<vmem>>, vector<1x4x8x128xf32>,
    } else {
    }
    return
  }
  func.func @transform_0(%arg0: i32, %arg1: i32) -> (i32, i32) {
    %c1_i32 = arith.constant 1 : i32
    %0 = arith.muli %arg0, %c1_i32 : i32
    %1 = arith.addi %0, %arg1 : i32
    %c0_i32 = arith.constant 0 : i32
    %2 = arith.minsi %1, %c0_i32 : i32
    %c0_i32_0 = arith.constant 0 : i32
    %c0_i32_1 = arith.constant 0 : i32
    return %2, %c0_i32_0 : i32, i32
  }
  func.func @transform_1(%arg0: i32, %arg1: i32) -> (i32, i32) {
    %c1_i32 = arith.constant 1 : i32
    %0 = arith.muli %arg0, %c1_i32 : i32
    %1 = arith.addi %0, %arg1 : i32
    %c0_i32 = arith.constant 0 : i32
    %2 = arith.minsi %1, %c0_i32 : i32
    %c0_i32_0 = arith.constant 0 : i32
    %c0_i32_1 = arith.constant 0 : i32
    return %2, %c0_i32_0 : i32, i32
  }
  func.func @transform_2(%arg0: i32, %arg1: i32) -> (i32, i32, i32, i32) {
    %c0_i32 = arith.constant 0 : i32
    %c0_i32_0 = arith.constant 0 : i32
    %c0_i32_1 = arith.constant 0 : i32
    %c0_i32_2 = arith.constant 0 : i32
    return %arg0, %c0_i32, %c0_i32_0, %c0_i32_1 : i32, i32, i32, i32
  }
}

</mosaic_0001>

<llo_original>
// kernel: tpu_custom_call.1
$region0: #{tpu_custom_call.1}
  #allocation0 [shape = 'u32[]', space=smem, size = 0x4, offset = 0x4, fixed_abs, tag = 'smem constant byte address 0x4 - core index']
  #allocation1 [shape = 'u32[144,128]{1,0:T(1,128)}', space=vmem, size = 0x12000, scoped, tag = 'internal scratch']
  #allocation2 [shape = 'f32[4,8,128]{2,1,0:T(8,128)}', space=vmem, size = 0x4000, scoped, tag = 'scratch operand']
  %s0 = inlined_call_operand.hbm [shape: f32[16,128], index: 0, kind: input, shape index: {}]
  %s1 = inlined_call_operand.hbm [shape: f32[16,128], index: 1, kind: input, shape index: {}]
  %s2 = inlined_call_operand.hbm [shape: f32[2,4,8,128], index: 2, kind: output, shape index: {}]
  %s3 = sld [smem:[#allocation0]]
  $region65: #{tpu_custom_call.1} parent=0
    _
  %s5 = ssub.s32 1, %s3
  %s6 = scalar_select 0, %s5, %s3
  $region1: #{tpu_custom_call.1} parent=0
    #allocation3 [shape = 'u8[16384]{0}', space=vmem, size = 0x4000, scoped, tag = 'input window, operand 0']
    #allocation4 [shape = 's32[2]{0}', space=sflag, size = 0x8, scoped, tag = 'scoped memory for tpu_custom_call.1']
    #allocation5 [shape = 's32[2]{0}', space=sflag, size = 0x8, scoped, tag = 'scoped memory for tpu_custom_call.1']
    #allocation6 [shape = 'u8[16384]{0}', space=vmem, size = 0x4000, scoped, tag = 'input window, operand 1']
    #allocation7 [shape = 's32[2]{0}', space=sflag, size = 0x8, scoped, tag = 'scoped memory for tpu_custom_call.1']
    #allocation8 [shape = 'u8[32768]{0}', space=vmem, size = 0x8000, scoped, tag = 'output window, operand 0']
    %7 = vsyncpa [#allocation4], 0
    %s8 = scalar_lea.sflag [#allocation4], 1
    %9 = vsyncpa %s8, 0
    %10 = vsyncpa [#allocation7], 0
    %s11 = scalar_lea.sflag [#allocation7], 1
    %12 = vsyncpa %s11, 0
    %13 = vsyncpa [#allocation5], 0
    %s14 = scalar_lea.sflag [#allocation5], 1
    %15 = vsyncpa %s14, 0
    loop: start=0, step=1, limit=4
    $region2: #{tpu_custom_call.1} parent=1 // loop_pre_header
      _
    $region3: #{tpu_custom_call.1} parent=1 // loop_header
      %s17 = sphi 0, %s21
      %p18 = scmp.ge.s32.totalorder %s17, 4
      %s24 = sphi 0, %s36
      %s25 = sphi 0, %s32
      %s26 = sphi 0, %s24
      %s27 = sphi 0, %s25
      %s28 = sphi 0, %s26
      %s29 = sphi 0, %s27
      %s45 = sphi 0, %s47
      %s48 = sphi 0, %s45
      %s49 = sphi 0, %s48
      %s65 = sphi 0, %s49
      %s77 = sphi 0, %s79
      %s80 = sphi 0, %s77
      %s81 = sphi 0, %s80
      %s97 = sphi 0, %s81
      %s103 = sphi 0, %s105
      %s106 = sphi 0, %s103
      %s107 = sphi 0, %s106
      %s123 = sphi 0, %s107
    $region4: #{tpu_custom_call.1} parent=1 // loop_header_branch
      %20 = sbr.rel (%p18) target = $region8
    $region5: #{tpu_custom_call.1} parent=1 // loop_body
      %s22 = ssub.s32 %s17, 1
      %s23 = ssub.s32 %s17, 2
      %s30 = sadd.s32 1, %s25
      %p31 = scmp.ge.s32.totalorder %s30, 1
      %s32 = scalar_select %p31, 0, %s30
      %s33 = sadd.s32 1, %s24
      %s34 = scalar_select %p31, %s33, %s24
      %p35 = scmp.ge.s32.totalorder %s34, 2
      %s36 = scalar_select %p35, 0, %s34
      %s37 = sadd.s32 %s24, %s25
      %p38 = scmp.lt.s32.totalorder %s37, 0
      %s39 = scalar_select %p38, %s37, 0
      %s40 = sadd.s32 %s36, %s32
      %p41 = scmp.lt.s32.totalorder %s40, 0
      %s42 = scalar_select %p41, %s40, 0
      %s43 = ssub.s32 %s39, %s42
      %p44 = scmp.eq.s32.totalorder %s43, 0
      %s46 = sadd.s32 %s45, 1
      %s47 = scalar_select %p44, %s45, %s46
      %p50 = pneg %p44
      %p51 = scmp.eq.s32.totalorder %s17, 1
      %p52 = por %p50, %p51
      %p53 = scmp.ne.s32.totalorder %s45, %s48
      %p54 = scmp.eq.s32.totalorder %s17, 0
      %p55 = por %p53, %p54
      %p56 = scmp.ne.s32.totalorder %s45, %s48
      %p57 = scmp.eq.s32.totalorder %s22, 1
      %p58 = por %p56, %p57
      %p59 = scmp.ne.s32.totalorder %s48, %s49
      %p60 = scmp.eq.s32.totalorder %s22, 0
      %p61 = por %p59, %p60
      %p62 = scmp.ne.s32.totalorder %s48, %s49
      %p63 = scmp.eq.s32.totalorder %s23, 1
      %p64 = por %p62, %p63
      %p66 = scmp.ne.s32.totalorder %s49, %s65
      %p67 = scmp.eq.s32.totalorder %s23, 0
      %p68 = por %p66, %p67
      %s69 = sadd.s32 %s24, %s25
      %p70 = scmp.lt.s32.totalorder %s69, 0
      %s71 = scalar_select %p70, %s69, 0
      %s72 = sadd.s32 %s36, %s32
      %p73 = scmp.lt.s32.totalorder %s72, 0
      %s74 = scalar_select %p73, %s72, 0
      %s75 = ssub.s32 %s71, %s74
      %p76 = scmp.eq.s32.totalorder %s75, 0
      %s78 = sadd.s32 %s77, 1
      %s79 = scalar_select %p76, %s77, %s78
      %p82 = pneg %p76
      %p83 = scmp.eq.s32.totalorder %s17, 1
      %p84 = por %p82, %p83
      %p85 = scmp.ne.s32.totalorder %s77, %s80
      %p86 = scmp.eq.s32.totalorder %s17, 0
      %p87 = por %p85, %p86
      %p88 = scmp.ne.s32.totalorder %s77, %s80
      %p89 = scmp.eq.s32.totalorder %s22, 1
      %p90 = por %p88, %p89
      %p91 = scmp.ne.s32.totalorder %s80, %s81
      %p92 = scmp.eq.s32.totalorder %s22, 0
      %p93 = por %p91, %p92
      %p94 = scmp.ne.s32.totalorder %s80, %s81
      %p95 = scmp.eq.s32.totalorder %s23, 1
      %p96 = por %p94, %p95
      %p98 = scmp.ne.s32.totalorder %s81, %s97
      %p99 = scmp.eq.s32.totalorder %s23, 0
      %p100 = por %p98, %p99
      %s101 = ssub.s32 %s24, %s36
      %p102 = scmp.eq.s32.totalorder %s101, 0
      %s104 = sadd.s32 %s103, 1
      %s105 = scalar_select %p102, %s103, %s104
      %p108 = pneg %p102
      %p109 = scmp.eq.s32.totalorder %s17, 1
      %p110 = por %p108, %p109
      %p111 = scmp.ne.s32.totalorder %s103, %s106
      %p112 = scmp.eq.s32.totalorder %s17, 0
      %p113 = por %p111, %p112
      %p114 = scmp.ne.s32.totalorder %s103, %s106
      %p115 = scmp.eq.s32.totalorder %s22, 1
      %p116 = por %p114, %p115
      %p117 = scmp.ne.s32.totalorder %s106, %s107
      %p118 = scmp.eq.s32.totalorder %s22, 0
      %p119 = por %p117, %p118
      %p120 = scmp.ne.s32.totalorder %s106, %s107
      %p121 = scmp.eq.s32.totalorder %s23, 1
      %p122 = por %p120, %p121
      %p124 = scmp.ne.s32.totalorder %s107, %s123
      %p125 = scmp.eq.s32.totalorder %s23, 0
      %p126 = por %p124, %p125
      %p127 = scmp.le.s32.totalorder 1, %s17
      %p128 = scmp.lt.s32.totalorder %s17, 3
      %p129 = pnand %p127, %p128
      %p130 = pneg %p129
      // Predicated region
      $region9: #{tpu_custom_call.1} parent=5 // pred_check
        _
      $region10: #{tpu_custom_call.1} parent=5 // pred_check_branch
        %132 = sbr.rel (%p129) target = $region12
      $region11: #{tpu_custom_call.1} parent=5 // pred_region
        %s133 = ssub.s32 %s17, 1
      $region12: #{tpu_custom_call.1} parent=5 // pred_fallthru
        _
      %p134 = scmp.lt.s32.totalorder %s17, 2
      // Predicated region
      $region13: #{tpu_custom_call.1} parent=5 // pred_check
        %p135 = pneg %p134
      $region14: #{tpu_custom_call.1} parent=5 // pred_check_branch
        %137 = sbr.rel (%p135) target = $region16
      $region15: #{tpu_custom_call.1} parent=5 // pred_region
        // Predicated region
        $region17: #{tpu_custom_call.1} parent=15 // pred_check
          %p138 = pneg %p55
        $region18: #{tpu_custom_call.1} parent=15 // pred_check_branch
          %140 = sbr.rel (%p138) target = $region20
        $region19: #{tpu_custom_call.1} parent=15 // pred_region
          %s141 = sand.u32 %s45, 1
          %s142 = scalar_lea.sflag [#allocation4], %s141
          %s143 = sand.u32 %s45, 1
          %s144 = smul.addr %s143, 16
          %s145 = scalar_lea.vmem [#allocation3], %s144
          %s146 = sadd.s32 %s24, %s25
          %p147 = scmp.lt.s32.totalorder %s146, 0
          %s148 = scalar_select %p147, %s146, 0
          %s149 = smul.u32 2, %s148
          %s151 = ssub.s32 256, 256
          %152 = vsyncadd %s142, %s151
          %s153 = smul.addr %s149, 128
          %s154 = scalar_lea.hbm %s0, %s153
          %s155 = sshll.u32 %s145, 4
          %s156 = int_to_ptr.vmem [resolvable:$true] %s155
          %161 = dma.hbm_to_vmem [thread:$0]  %s154, 256, %s156, %s142, 128, 128, 8
        $region20: #{tpu_custom_call.1} parent=15 // pred_fallthru
          _
        // Predicated region
        $region21: #{tpu_custom_call.1} parent=15 // pred_check
          %p162 = pneg %p87
        $region22: #{tpu_custom_call.1} parent=15 // pred_check_branch
          %164 = sbr.rel (%p162) target = $region24
        $region23: #{tpu_custom_call.1} parent=15 // pred_region
          %s165 = sand.u32 %s77, 1
          %s166 = scalar_lea.sflag [#allocation7], %s165
          %s167 = sand.u32 %s77, 1
          %s168 = smul.addr %s167, 16
          %s169 = scalar_lea.vmem [#allocation6], %s168
          %s170 = sadd.s32 %s24, %s25
          %p171 = scmp.lt.s32.totalorder %s170, 0
          %s172 = scalar_select %p171, %s170, 0
          %s173 = smul.u32 2, %s172
          %s175 = ssub.s32 256, 256
          %176 = vsyncadd %s166, %s175
          %s177 = smul.addr %s173, 128
          %s178 = scalar_lea.hbm %s1, %s177
          %s179 = sshll.u32 %s169, 4
          %s180 = int_to_ptr.vmem [resolvable:$true] %s179
          %185 = dma.hbm_to_vmem [thread:$0]  %s178, 256, %s180, %s166, 128, 128, 8
        $region24: #{tpu_custom_call.1} parent=15 // pred_fallthru
          _
      $region16: #{tpu_custom_call.1} parent=5 // pred_fallthru
        _
      %p186 = scmp.le.s32.totalorder 1, %s17
      %p187 = scmp.lt.s32.totalorder %s17, 3
      %p188 = pnand %p186, %p187
      %p189 = pneg %p188
      // Predicated region
      $region25: #{tpu_custom_call.1} parent=5 // pred_check
        _
      $region26: #{tpu_custom_call.1} parent=5 // pred_check_branch
        %191 = sbr.rel (%p188) target = $region28
      $region27: #{tpu_custom_call.1} parent=5 // pred_region
        %s192 = ssub.s32 %s17, 1
        %s193 = sand.u32 %s48, 1
        %s194 = scalar_lea.sflag [#allocation4], %s193
        %s195 = sand.u32 %s48, 1
        %s196 = smul.addr %s195, 16
        %s197 = scalar_lea.vmem [#allocation3], %s196
        // Predicated region
        $region29: #{tpu_custom_call.1} parent=27 // pred_check
          %p198 = pneg %p61
        $region30: #{tpu_custom_call.1} parent=27 // pred_check_branch
          %200 = sbr.rel (%p198) target = $region32
        $region31: #{tpu_custom_call.1} parent=27 // pred_region
          %201 = dma.done %s194, 256
        $region32: #{tpu_custom_call.1} parent=27 // pred_fallthru
          _
        %s202 = sand.u32 %s80, 1
        %s203 = scalar_lea.sflag [#allocation7], %s202
        %s204 = sand.u32 %s80, 1
        %s205 = smul.addr %s204, 16
        %s206 = scalar_lea.vmem [#allocation6], %s205
        // Predicated region
        $region33: #{tpu_custom_call.1} parent=27 // pred_check
          %p207 = pneg %p93
        $region34: #{tpu_custom_call.1} parent=27 // pred_check_branch
          %209 = sbr.rel (%p207) target = $region36
        $region35: #{tpu_custom_call.1} parent=27 // pred_region
          %210 = dma.done %s203, 256
        $region36: #{tpu_custom_call.1} parent=27 // pred_fallthru
          _
        %s211 = sand.u32 %s48, 1
        %s212 = scalar_lea.sflag [#allocation4], %s211
        %s213 = sand.u32 %s48, 1
        %s214 = smul.addr %s213, 16
        %s215 = scalar_lea.vmem [#allocation3], %s214
        %p216 = pneg %p61
        %p217 = pneg %p58
        %s218 = sand.u32 %s80, 1
        %s219 = scalar_lea.sflag [#allocation7], %s218
        %s220 = sand.u32 %s80, 1
        %s221 = smul.addr %s220, 16
        %s222 = scalar_lea.vmem [#allocation6], %s221
        %p223 = pneg %p93
        %p224 = pneg %p90
        %p225 = pneg %p119
        %p226 = pneg %p116
        %s227 = sand.u32 %s106, 1
        %s228 = scalar_lea.sflag [#allocation5], %s227
        %s229 = sand.u32 %s106, 1
        %s230 = smul.addr %s229, 32
        %s231 = scalar_lea.vmem [#allocation8], %s230
        %s232 = sadd.s32 %s26, %s27
        %p233 = scmp.lt.s32.totalorder %s232, 0
        %s234 = scalar_select %p233, %s232, 0
        %s235 = smul.u32 2, %s234
        %s236 = sadd.s32 %s26, %s27
        %p237 = scmp.lt.s32.totalorder %s236, 0
        %s238 = scalar_select %p237, %s236, 0
        %s239 = smul.u32 2, %s238
        %p240 = scmp.eq.s32.totalorder %s27, 0
        // Predicated region
        $region37: #{tpu_custom_call.1} parent=27 // pred_check
          %p241 = pneg %p240
        $region38: #{tpu_custom_call.1} parent=27 // pred_check_branch
          %243 = sbr.rel (%p241) target = $region40
        $region39: #{tpu_custom_call.1} parent=27 // pred_region
          %244 = vst [vmem:[#allocation2] sm:$0xff] 0.0
          %245 = vst [vmem:[#allocation2 + $0x8] sm:$0xff] 0.0
          %246 = vst [vmem:[#allocation2 + $0x10] sm:$0xff] 0.0
          %247 = vst [vmem:[#allocation2 + $0x18] sm:$0xff] 0.0
        $region40: #{tpu_custom_call.1} parent=27 // pred_fallthru
          _
        %s248 = sadd.s32 %s26, %s27
        %s249 = smul.u32 %s248, 16
        %s250 = sadd.s32 %s249, 16
        %p251 = scmp.le.s32.totalorder %s250, 16
        // Predicated region
        $region41: #{tpu_custom_call.1} parent=27 // pred_check
          %p252 = pneg %p251
        $region42: #{tpu_custom_call.1} parent=27 // pred_check_branch
          %254 = sbr.rel (%p252) target = $region44
        $region43: #{tpu_custom_call.1} parent=27 // pred_region
          %v255 = vld [vmem:[%s206] sm:$0xff]
          %v256 = vld [vmem:[%s206 + $0x8] sm:$0xff]
          %vm257 = vcmp.eq.f32.partialorder %v255, 1.0
          %vm258 = vcmp.eq.f32.partialorder %v256, 1.0
          %vm259 = vcmp.eq.f32.partialorder %v255, 0.0
          %vm260 = vcmp.eq.f32.partialorder %v256, 0.0
          %v261 = vld [vmem:[%s197] sm:$0xff]
          %v262 = vld [vmem:[%s197 + $0x8] sm:$0xff]
          %v263 = vmax.f32 %v261, 0.0
          %v264 = vmax.f32 %v262, 0.0
          %v265 = vadd.f32 %v263, %v263
          %v266 = vadd.f32 %v264, %v264
          %v267 = vsub.f32 %v261, %v265
          %v268 = vsub.f32 %v262, %v266
          %v269 = vmul.f32 %v267, 1.442695
          %v270 = vpow.pop %v269
          %v271 = vmul.f32 %v268, 1.442695
          %v272 = vpow.pop %v271
          %v273 = vadd.f32 %v270, 1.0
          %v274 = vlog2.pop %v273
          %v275 = vmul.f32 %v274, 0.6931472
          %v276 = vmul.f32 -0.5, %v270
          %v277 = vadd.f32 %v276, 1.0
          %v278 = vmul.f32 %v277, %v270
          %v279 = vand.u32 2147483647, %v270
          %vm280 = vcmp.lt.f32.partialorder %v279, 0.0004427343
          %v281 = vsel %vm280, %v278, %v275
          %v282 = vadd.f32 %v272, 1.0
          %v283 = vlog2.pop %v282
          %v284 = vmul.f32 %v283, 0.6931472
          %v285 = vmul.f32 -0.5, %v272
          %v286 = vadd.f32 %v285, 1.0
          %v287 = vmul.f32 %v286, %v272
          %v288 = vand.u32 2147483647, %v272
          %vm289 = vcmp.lt.f32.partialorder %v288, 0.0004427343
          %v290 = vsel %vm289, %v287, %v284
          %v291 = vadd.f32 %v270, 1.0
          %v292 = vadd.f32 %v272, 1.0
          %v293 = vrcp.pop %v291
          %v294 = vmul.f32 1.0, %v293
          %v295 = vrcp.pop %v292
          %v296 = vmul.f32 1.0, %v295
          %vm297 = vcmp.ge.f32.partialorder %v261, 0.0
          %vm298 = vcmp.ge.f32.partialorder %v262, 0.0
          %v299 = vmul.f32 %v270, %v294
          %v300 = vmul.f32 %v272, %v296
          %v301 = vsel %vm297, %v294, %v299
          %v302 = vsel %vm298, %v296, %v300
          %v303 = vmax.f32 %v301, 0.0001
          %v304 = vmax.f32 %v302, 0.0001
          %v305 = vmin.f32 %v303, 0.9999
          %v306 = vmin.f32 %v304, 0.9999
          %v307 = vsub.f32 %v261, %v263
          %v308 = vsub.f32 %v262, %v264
          %v309 = vsub.f32 %v307, %v281
          %v310 = vsub.f32 %v308, %v290
          %v311 = vmax.f32 %v309, -9.2103405
          %v312 = vmax.f32 %v310, -9.2103405
          %v313 = vmin.f32 %v311, -0.000100005
          %v314 = vmin.f32 %v312, -0.000100005
          %v315 = vadd.f32 %v263, %v281
          %v316 = vadd.f32 %v264, %v290
          %v317 = vsub.f32 0.0, %v315
          %v318 = vsub.f32 0.0, %v316
          %v319 = vsub.f32 1.0, %v305
          %v320 = vsub.f32 1.0, %v306
          %v321 = vmul.f32 %v319, %v319
          %v322 = vmul.f32 %v320, %v320
          %v323 = vsel %vm257, %v321, 0.0
          %v324 = vsel %vm258, %v322, 0.0
          %v325 = vmul.f32 %v305, %v305
          %v326 = vmul.f32 %v306, %v306
          %v327 = vsel %vm259, %v325, 0.0
          %v328 = vsel %vm260, %v326, 0.0
          %v329 = vld [vmem:[#allocation2] sm:$0xff]
          %v330 = vmul.f32 %v323, %v313
          %v331 = vmul.f32 %v324, %v314
          %v332 = vadd.f32 %v330, %v331
          %v333 = vadd.f32 %v329, %v332
          %334 = vst [vmem:[#allocation2] sm:$0xff] %v333
          %s335 = scalar_lea.vmem [#allocation2], 8
          %v336 = vld [vmem:[%s335] sm:$0xff]
          %v337 = vadd.f32 %v323, %v324
          %v338 = vadd.f32 %v336, %v337
          %339 = vst [vmem:[%s335] sm:$0xff] %v338
          %s340 = scalar_lea.vmem [#allocation2], 16
          %v341 = vld [vmem:[%s340] sm:$0xff]
          %v342 = vmul.f32 %v327, %v317
          %v343 = vmul.f32 %v328, %v318
          %v344 = vadd.f32 %v342, %v343
          %v345 = vadd.f32 %v341, %v344
          %346 = vst [vmem:[%s340] sm:$0xff] %v345
          %s347 = scalar_lea.vmem [#allocation2], 24
          %v348 = vld [vmem:[%s347] sm:$0xff]
          %v349 = vadd.f32 %v327, %v328
          %v350 = vadd.f32 %v348, %v349
          %351 = vst [vmem:[%s347] sm:$0xff] %v350
        $region44: #{tpu_custom_call.1} parent=27 // pred_fallthru
          _
        %p352 = scmp.gt.s32.totalorder %s250, 16
        // Predicated region
        $region45: #{tpu_custom_call.1} parent=27 // pred_check
          %p353 = pneg %p352
        $region46: #{tpu_custom_call.1} parent=27 // pred_check_branch
          %355 = sbr.rel (%p353) target = $region48
        $region47: #{tpu_custom_call.1} parent=27 // pred_region
          %v356 = vlaneseq
          %v357 = vshrl.u32 %v356, 7
          %v358 = vadd.s32 %v357, 8
          %v359 = vstv %s249
          %v360 = vadd.s32 %v359, %v357
          %v361 = vadd.s32 %v359, %v358
          %vm362 = vcmp.lt.s32.totalorder %v360, 16
          %vm363 = vcmp.lt.s32.totalorder %v361, 16
          %v364 = vld [vmem:[%s206] sm:$0xff]
          %v365 = vld [vmem:[%s206 + $0x8] sm:$0xff]
          %vm366 = vcmp.eq.f32.partialorder %v364, 1.0
          %vm367 = vcmp.eq.f32.partialorder %v365, 1.0
          %vm368 = vcmp.eq.f32.partialorder %v364, 0.0
          %vm369 = vcmp.eq.f32.partialorder %v365, 0.0
          %vm370 = vmand %vm366, %vm362
          %vm371 = vmand %vm367, %vm363
          %vm372 = vmand %vm368, %vm362
          %vm373 = vmand %vm369, %vm363
          %v374 = vld [vmem:[%s197] sm:$0xff]
          %v375 = vld [vmem:[%s197 + $0x8] sm:$0xff]
          %v376 = vsel %vm362, %v374, 0.0
          %v377 = vsel %vm363, %v375, 0.0
          %v378 = vmax.f32 %v376, 0.0
          %v379 = vmax.f32 %v377, 0.0
          %v380 = vadd.f32 %v378, %v378
          %v381 = vadd.f32 %v379, %v379
          %v382 = vsub.f32 %v376, %v380
          %v383 = vsub.f32 %v377, %v381
          %v384 = vmul.f32 %v382, 1.442695
          %v385 = vpow.pop %v384
          %v386 = vmul.f32 %v383, 1.442695
          %v387 = vpow.pop %v386
          %v388 = vadd.f32 %v385, 1.0
          %v389 = vlog2.pop %v388
          %v390 = vmul.f32 %v389, 0.6931472
          %v391 = vmul.f32 -0.5, %v385
          %v392 = vadd.f32 %v391, 1.0
          %v393 = vmul.f32 %v392, %v385
          %v394 = vand.u32 2147483647, %v385
          %vm395 = vcmp.lt.f32.partialorder %v394, 0.0004427343
          %v396 = vsel %vm395, %v393, %v390
          %v397 = vadd.f32 %v387, 1.0
          %v398 = vlog2.pop %v397
          %v399 = vmul.f32 %v398, 0.6931472
          %v400 = vmul.f32 -0.5, %v387
          %v401 = vadd.f32 %v400, 1.0
          %v402 = vmul.f32 %v401, %v387
          %v403 = vand.u32 2147483647, %v387
          %vm404 = vcmp.lt.f32.partialorder %v403, 0.0004427343
          %v405 = vsel %vm404, %v402, %v399
          %v406 = vadd.f32 %v385, 1.0
          %v407 = vadd.f32 %v387, 1.0
          %v408 = vrcp.pop %v406
          %v409 = vmul.f32 1.0, %v408
          %v410 = vrcp.pop %v407
          %v411 = vmul.f32 1.0, %v410
          %vm412 = vcmp.ge.f32.partialorder %v376, 0.0
          %vm413 = vcmp.ge.f32.partialorder %v377, 0.0
          %v414 = vmul.f32 %v385, %v409
          %v415 = vmul.f32 %v387, %v411
          %v416 = vsel %vm412, %v409, %v414
          %v417 = vsel %vm413, %v411, %v415
          %v418 = vmax.f32 %v416, 0.0001
          %v419 = vmax.f32 %v417, 0.0001
          %v420 = vmin.f32 %v418, 0.9999
          %v421 = vmin.f32 %v419, 0.9999
          %v422 = vsub.f32 %v376, %v378
          %v423 = vsub.f32 %v377, %v379
          %v424 = vsub.f32 %v422, %v396
          %v425 = vsub.f32 %v423, %v405
          %v426 = vmax.f32 %v424, -9.2103405
          %v427 = vmax.f32 %v425, -9.2103405
          %v428 = vmin.f32 %v426, -0.000100005
          %v429 = vmin.f32 %v427, -0.000100005
          %v430 = vadd.f32 %v378, %v396
          %v431 = vadd.f32 %v379, %v405
          %v432 = vsub.f32 0.0, %v430
          %v433 = vsub.f32 0.0, %v431
          %v434 = vsub.f32 1.0, %v420
          %v435 = vsub.f32 1.0, %v421
          %v436 = vmul.f32 %v434, %v434
          %v437 = vmul.f32 %v435, %v435
          %v438 = vsel %vm370, %v436, 0.0
          %v439 = vsel %vm371, %v437, 0.0
          %v440 = vmul.f32 %v420, %v420
          %v441 = vmul.f32 %v421, %v421
          %v442 = vsel %vm372, %v440, 0.0
          %v443 = vsel %vm373, %v441, 0.0
          %v444 = vld [vmem:[#allocation2] sm:$0xff]
          %v445 = vmul.f32 %v438, %v428
          %v446 = vmul.f32 %v439, %v429
          %v447 = vadd.f32 %v445, %v446
          %v448 = vadd.f32 %v444, %v447
          %449 = vst [vmem:[#allocation2] sm:$0xff] %v448
          %s450 = scalar_lea.vmem [#allocation2], 8
          %v451 = vld [vmem:[%s450] sm:$0xff]
          %v452 = vadd.f32 %v438, %v439
          %v453 = vadd.f32 %v451, %v452
          %454 = vst [vmem:[%s450] sm:$0xff] %v453
          %s455 = scalar_lea.vmem [#allocation2], 16
          %v456 = vld [vmem:[%s455] sm:$0xff]
          %v457 = vmul.f32 %v442, %v432
          %v458 = vmul.f32 %v443, %v433
          %v459 = vadd.f32 %v457, %v458
          %v460 = vadd.f32 %v456, %v459
          %461 = vst [vmem:[%s455] sm:$0xff] %v460
          %s462 = scalar_lea.vmem [#allocation2], 24
          %v463 = vld [vmem:[%s462] sm:$0xff]
          %v464 = vadd.f32 %v442, %v443
          %v465 = vadd.f32 %v463, %v464
          %466 = vst [vmem:[%s462] sm:$0xff] %v465
        $region48: #{tpu_custom_call.1} parent=27 // pred_fallthru
          _
        // Predicated region
        $region49: #{tpu_custom_call.1} parent=27 // pred_check
          %p467 = pneg %p240
        $region50: #{tpu_custom_call.1} parent=27 // pred_check_branch
          %469 = sbr.rel (%p467) target = $region52
        $region51: #{tpu_custom_call.1} parent=27 // pred_region
          %v470 = vld [vmem:[#allocation2] sm:$0xff]
          %v471 = vld [vmem:[#allocation2 + $0x8] sm:$0xff]
          %v472 = vld [vmem:[#allocation2 + $0x10] sm:$0xff]
          %v473 = vld [vmem:[#allocation2 + $0x18] sm:$0xff]
          %474 = vst [vmem:[%s231] sm:$0xff] %v470
          %475 = vst [vmem:[%s231 + $0x8] sm:$0xff] %v471
          %476 = vst [vmem:[%s231 + $0x10] sm:$0xff] %v472
          %477 = vst [vmem:[%s231 + $0x18] sm:$0xff] %v473
        $region52: #{tpu_custom_call.1} parent=27 // pred_fallthru
          _
        %s478 = sand.u32 %s106, 1
        %s479 = scalar_lea.sflag [#allocation5], %s478
        %s480 = sand.u32 %s106, 1
        %s481 = smul.addr %s480, 32
        %s482 = scalar_lea.vmem [#allocation8], %s481
        // Predicated region
        $region53: #{tpu_custom_call.1} parent=27 // pred_check
          %p483 = pneg %p116
        $region54: #{tpu_custom_call.1} parent=27 // pred_check_branch
          %485 = sbr.rel (%p483) target = $region56
        $region55: #{tpu_custom_call.1} parent=27 // pred_region
          %s487 = ssub.s32 512, 512
          %488 = vsyncadd %s479, %s487
          %s489 = smul.addr %s26, 4
          %s490 = smul.addr %s489, 128
          %s491 = scalar_lea.hbm %s2, %s490
          %s492 = sshll.u32 %s482, 4
          %s493 = int_to_ptr.vmem [resolvable:$true] %s492
          %498 = dma.vmem_to_hbm [thread:$0]  %s493, 512, %s491, %s479, 128, 128, 8
        $region56: #{tpu_custom_call.1} parent=27 // pred_fallthru
          _
      $region28: #{tpu_custom_call.1} parent=5 // pred_fallthru
        _
      %p499 = scmp.le.s32.totalorder 2, %s17
      // Predicated region
      $region57: #{tpu_custom_call.1} parent=5 // pred_check
        %p500 = pneg %p499
      $region58: #{tpu_custom_call.1} parent=5 // pred_check_branch
        %502 = sbr.rel (%p500) target = $region60
      $region59: #{tpu_custom_call.1} parent=5 // pred_region
        %s503 = ssub.s32 %s17, 2
        // Predicated region
        $region61: #{tpu_custom_call.1} parent=59 // pred_check
          %p504 = pneg %p122
        $region62: #{tpu_custom_call.1} parent=59 // pred_check_branch
          %506 = sbr.rel (%p504) target = $region64
        $region63: #{tpu_custom_call.1} parent=59 // pred_region
          %s507 = sand.u32 %s107, 1
          %s508 = scalar_lea.sflag [#allocation5], %s507
          %s509 = sand.u32 %s107, 1
          %s510 = smul.addr %s509, 32
          %s511 = scalar_lea.vmem [#allocation8], %s510
          %512 = dma.done %s508, 512
        $region64: #{tpu_custom_call.1} parent=59 // pred_fallthru
          _
      $region60: #{tpu_custom_call.1} parent=5 // pred_fallthru
        _
    $region6: #{tpu_custom_call.1} parent=1 // loop_footer
      %s21 = sadd.s32 1, %s17
    $region7: #{tpu_custom_call.1} parent=1 // loop_footer_branch
      %16 = sbr.rel target = $region3
    $region8: #{tpu_custom_call.1} parent=1 // loop_exit
      _
    %513 = vsyncpa [#allocation4], 1
    %s514 = scalar_lea.sflag [#allocation4], 1
    %515 = vsyncpa %s514, 1
    %516 = vsyncpa [#allocation7], 1
    %s517 = scalar_lea.sflag [#allocation7], 1
    %518 = vsyncpa %s517, 1
    %519 = vsyncpa [#allocation5], 1
    %s520 = scalar_lea.sflag [#allocation5], 1
    %521 = vsyncpa %s520, 1

</llo_original>
